<compile_context>
chip_gen: v6e
topology: v6e:2x2x1
jax: 0.10.0
libtpu: 0.0.40
codegen_flags: <defaults>
</compile_context>

<pallas_src>
import functools

import jax
import jax.numpy as jnp
from jax.experimental import pallas as pl
from jax.experimental.pallas import tpu as pltpu


def _round_up(n: int, m: int) -> int:
    return ((n + m - 1) // m) * m


def dueling_dqn_kernel(x_ref, w1_ref, b1_ref, w2_ref, b2_ref, wh_ref, bh_ref,
                       out_ref):
    """Whole forward pass on one batch tile, all layers fused in VMEM.

    x_ref:  (tile_b, state_dim)      bf16
    w1_ref: (state_dim, fc1_pad)     bf16    b1_ref: (1, fc1_pad)  f32
    w2_ref: (fc1_pad,  fc2_pad)      bf16    b2_ref: (1, fc2_pad)  f32
    wh_ref: (fc2_pad,  head_pad)     bf16    bh_ref: (1, head_pad) f32
    out_ref:(tile_b,   head_pad)     f32   -- [V | A | zero padding]
    """
    x = x_ref[...]                                                    # bf16
    # Linear(state_dim, fc1) + ReLU   (f32 accumulation / activation)
    h1 = jnp.dot(x, w1_ref[...], preferred_element_type=jnp.float32) + b1_ref[...]
    h1 = jnp.maximum(h1, 0.0)
    # Linear(fc1, fc2) + Tanh
    h2 = jnp.dot(h1.astype(jnp.bfloat16), w2_ref[...],
                 preferred_element_type=jnp.float32) + b2_ref[...]
    h2 = jnp.tanh(h2)
    # Fused V|A head: single lane-dense (padded-to-128) matmul + store.
    out_ref[...] = jnp.dot(h2.astype(jnp.bfloat16), wh_ref[...],
                           preferred_element_type=jnp.float32) + bh_ref[...]


@functools.partial(jax.jit, static_argnames=("tile_b",))
def dueling_dqn_forward(x, w1, b1, w2, b2, wv, bv, wa, ba, *, tile_b=512):
    """Returns (V, A) exactly like DuelingDeepQNetwork.forward.

    Weights are given as (in, out) (i.e. PyTorch weights pre-transposed) and
    biases as (1, out). All padding / fusion / bf16 casting happens here.
    """
    B, state_dim = x.shape
    fc1_dim = w1.shape[1]
    fc2_dim = w2.shape[1]
    action_dim = wa.shape[1]

    fc1_p = _round_up(fc1_dim, 128)
    fc2_p = _round_up(fc2_dim, 128)
    head = 1 + action_dim
    head_p = _round_up(head, 128)
    B_p = _round_up(B, tile_b)

    # Zero-pad lane dims to 128 multiples and fuse the two heads. Zero padding
    # keeps the math exact (padded h1/h2 columns are relu(0)=0 / tanh(0)=0 and
    # feed zero weight rows). bf16 operands, f32 biases/accumulation.
    w1_p = jnp.pad(w1, ((0, 0), (0, fc1_p - fc1_dim))).astype(jnp.bfloat16)
    b1_p = jnp.pad(b1, ((0, 0), (0, fc1_p - fc1_dim)))
    w2_p = jnp.pad(w2, ((0, fc1_p - fc1_dim), (0, fc2_p - fc2_dim))).astype(jnp.bfloat16)
    b2_p = jnp.pad(b2, ((0, 0), (0, fc2_p - fc2_dim)))
    wh = jnp.concatenate([wv, wa], axis=1)                  # (fc2, 1+action)
    bh = jnp.concatenate([bv, ba], axis=1)                  # (1,   1+action)
    wh_p = jnp.pad(wh, ((0, fc2_p - fc2_dim), (0, head_p - head))).astype(jnp.bfloat16)
    bh_p = jnp.pad(bh, ((0, 0), (0, head_p - head)))
    x_p = jnp.pad(x, ((0, B_p - B), (0, 0))).astype(jnp.bfloat16)

    grid = (B_p // tile_b,)

    # Constant block index => weights/biases stay VMEM-resident across steps.
    full = lambda shape: pl.BlockSpec(shape, lambda i: (0, 0))
    in_specs = [
        pl.BlockSpec((tile_b, state_dim), lambda i: (i, 0)),  # x: streamed
        full((state_dim, fc1_p)),                             # W1
        full((1, fc1_p)),                                     # b1
        full((fc1_p, fc2_p)),                                 # W2
        full((1, fc2_p)),                                     # b2
        full((fc2_p, head_p)),                                # Wh = [Wv|Wa] padded
        full((1, head_p)),                                    # bh
    ]
    out_specs = pl.BlockSpec((tile_b, head_p), lambda i: (i, 0))
    out_shape = jax.ShapeDtypeStruct((B_p, head_p), jnp.float32)

    out = pl.pallas_call(
        dueling_dqn_kernel,
        grid=grid,
        in_specs=in_specs,
        out_specs=out_specs,
        out_shape=out_shape,
        compiler_params=pltpu.CompilerParams(
            dimension_semantics=("parallel",)),
    )(x_p, w1_p, b1_p, w2_p, b2_p, wh_p, bh_p)

    V = out[:B, 0:1]
    A = out[:B, 1:head]
    return V, A


def init_linear_params(key, in_dim, out_dim):
    """PyTorch nn.Linear-style init (U[-1/sqrt(in), 1/sqrt(in)]), W as (in, out)."""
    kw, kb = jax.random.split(key)
    bound = 1.0 / jnp.sqrt(jnp.float32(in_dim))
    w = jax.random.uniform(kw, (in_dim, out_dim), jnp.float32, -bound, bound)
    b = jax.random.uniform(kb, (1, out_dim), jnp.float32, -bound, bound)
    return w, b


def reference_forward(x, w1, b1, w2, b2, wv, bv, wa, ba):
    h = jnp.maximum(x @ w1 + b1, 0.0)
    h = jnp.tanh(h @ w2 + b2)
    return h @ wv + bv, h @ wa + ba


if __name__ == "__main__":
    # Small shapes consistent with the module's forward.
    batch, state_dim, fc1_dim, fc2_dim, action_dim = 512, 16, 64, 32, 4

    key = jax.random.PRNGKey(0)
    kx, k1, k2, kv, ka = jax.random.split(key, 5)

    x = jax.random.normal(kx, (batch, state_dim), jnp.float32)
    w1, b1 = init_linear_params(k1, state_dim, fc1_dim)
    w2, b2 = init_linear_params(k2, fc1_dim, fc2_dim)
    wv, bv = init_linear_params(kv, fc2_dim, 1)
    wa, ba = init_linear_params(ka, fc2_dim, action_dim)

    # tile_b=256 -> 2 parallel grid steps (exercises pipelining / megacore).
    V, A = dueling_dqn_forward(x, w1, b1, w2, b2, wv, bv, wa, ba, tile_b=256)
    jax.block_until_ready((V, A))

    V_ref, A_ref = reference_forward(x, w1, b1, w2, b2, wv, bv, wa, ba)
    assert V.shape == (batch, 1) and A.shape == (batch, action_dim)
    # bf16 matmul operands (f32 accumulation) -> relaxed tolerance vs f32 ref.
    assert jnp.allclose(V, V_ref, atol=3e-2, rtol=3e-2)
    assert jnp.allclose(A, A_ref, atol=3e-2, rtol=3e-2)

    print("KERNEL_OK")
</pallas_src>

<mosaic_0001>
module attributes {stable_mosaic.version = 11 : i64} {
  func.func @dueling_dqn_kernel(%arg0: i32, %arg1: memref<256x16xbf16, #tpu.memory_space<vmem>>, %arg2: memref<16x128xbf16, #tpu.memory_space<vmem>>, %arg3: memref<1x128xf32, #tpu.memory_space<vmem>>, %arg4: memref<128x128xbf16, #tpu.memory_space<vmem>>, %arg5: memref<1x128xf32, #tpu.memory_space<vmem>>, %arg6: memref<128x128xbf16, #tpu.memory_space<vmem>>, %arg7: memref<1x128xf32, #tpu.memory_space<vmem>>, %arg8: memref<256x128xf32, #tpu.memory_space<vmem>>) attributes {dimension_semantics = [#tpu.dimension_semantics<parallel>], iteration_bounds = array<i64: 2>, scalar_prefetch = 0 : i64, scratch_operands = 0 : i64, tpu.core_type = #tpu.core_type<tc>, window_params = [{transform_indices = @transform_0, window_bounds = array<i64: 256, 16>}, {pipeline_mode = #tpu.pipeline_mode<synchronous>, transform_indices = @transform_1, window_bounds = array<i64: 16, 128>}, {pipeline_mode = #tpu.pipeline_mode<synchronous>, transform_indices = @transform_2, window_bounds = array<i64: 1, 128>}, {pipeline_mode = #tpu.pipeline_mode<synchronous>, transform_indices = @transform_3, window_bounds = array<i64: 128, 128>}, {pipeline_mode = #tpu.pipeline_mode<synchronous>, transform_indices = @transform_4, window_bounds = array<i64: 1, 128>}, {pipeline_mode = #tpu.pipeline_mode<synchronous>, transform_indices = @transform_5, window_bounds = array<i64: 128, 128>}, {pipeline_mode = #tpu.pipeline_mode<synchronous>, transform_indices = @transform_6, window_bounds = array<i64: 1, 128>}, {transform_indices = @transform_7, window_bounds = array<i64: 256, 128>}]} {
    %c0 = arith.constant 0 : index
    %c0_0 = arith.constant 0 : index
    %0 = vector.load %arg1[%c0, %c0_0] : memref<256x16xbf16, #tpu.memory_space<vmem>>, vector<256x16xbf16>
    %c0_1 = arith.constant 0 : index
    %c0_2 = arith.constant 0 : index
    %1 = vector.load %arg2[%c0_1, %c0_2] : memref<16x128xbf16, #tpu.memory_space<vmem>>, vector<16x128xbf16>
    %cst = arith.constant dense<0.000000e+00> : vector<256x128xf32>
    %2 = tpu.matmul %0, %1, %cst {dimension_numbers = #tpu.dot_dimension_numbers<[1], [0], [0], [1], [0, 0, 1, 1], [], []>} : vector<256x16xbf16>, vector<16x128xbf16>, vector<256x128xf32> -> vector<256x128xf32>
    %c0_3 = arith.constant 0 : index
    %c0_4 = arith.constant 0 : index
    %3 = vector.load %arg3[%c0_3, %c0_4] : memref<1x128xf32, #tpu.memory_space<vmem>>, vector<1x128xf32>
    %4 = vector.broadcast %3 : vector<1x128xf32> to vector<256x128xf32>
    %5 = arith.addf %2, %4 : vector<256x128xf32>
    %cst_5 = arith.constant 0.000000e+00 : f32
    %6 = vector.broadcast %cst_5 : f32 to vector<256x128xf32>
    %7 = arith.maximumf %5, %6 : vector<256x128xf32>
    %8 = arith.truncf %7 : vector<256x128xf32> to vector<256x128xbf16>
    %c0_6 = arith.constant 0 : index
    %c0_7 = arith.constant 0 : index
    %9 = vector.load %arg4[%c0_6, %c0_7] : memref<128x128xbf16, #tpu.memory_space<vmem>>, vector<128x128xbf16>
    %cst_8 = arith.constant dense<0.000000e+00> : vector<256x128xf32>
    %10 = tpu.matmul %8, %9, %cst_8 {dimension_numbers = #tpu.dot_dimension_numbers<[1], [0], [0], [1], [0, 0, 1, 1], [], []>} : vector<256x128xbf16>, vector<128x128xbf16>, vector<256x128xf32> -> vector<256x128xf32>
    %c0_9 = arith.constant 0 : index
    %c0_10 = arith.constant 0 : index
    %11 = vector.load %arg5[%c0_9, %c0_10] : memref<1x128xf32, #tpu.memory_space<vmem>>, vector<1x128xf32>
    %12 = vector.broadcast %11 : vector<1x128xf32> to vector<256x128xf32>
    %13 = arith.addf %10, %12 : vector<256x128xf32>
    %14 = math.tanh %13 : vector<256x128xf32>
    %15 = arith.truncf %14 : vector<256x128xf32> to vector<256x128xbf16>
    %c0_11 = arith.constant 0 : index
    %c0_12 = arith.constant 0 : index
    %16 = vector.load %arg6[%c0_11, %c0_12] : memref<128x128xbf16, #tpu.memory_space<vmem>>, vector<128x128xbf16>
    %cst_13 = arith.constant dense<0.000000e+00> : vector<256x128xf32>
    %17 = tpu.matmul %15, %16, %cst_13 {dimension_numbers = #tpu.dot_dimension_numbers<[1], [0], [0], [1], [0, 0, 1, 1], [], []>} : vector<256x128xbf16>, vector<128x128xbf16>, vector<256x128xf32> -> vector<256x128xf32>
    %c0_14 = arith.constant 0 : index
    %c0_15 = arith.constant 0 : index
    %18 = vector.load %arg7[%c0_14, %c0_15] : memref<1x128xf32, #tpu.memory_space<vmem>>, vector<1x128xf32>
    %19 = vector.broadcast %18 : vector<1x128xf32> to vector<256x128xf32>
    %20 = arith.addf %17, %19 : vector<256x128xf32>
    %c0_16 = arith.constant 0 : index
    %c0_17 = arith.constant 0 : index
    %21 = vector.load %arg8[%c0_16, %c0_17] : memref<256x128xf32, #tpu.memory_space<vmem>>, vector<256x128xf32>
    tpu.vector_store %arg8[%c0_16, %c0_17], %20 {strides = array<i32>} : memref<256x128xf32, #tpu.memory_space<vmem>>, vector<256x128xf32>,
    return
  }
  func.func @transform_0(%arg0: i32) -> (i32, i32) {
    %c0_i32 = arith.constant 0 : i32
    %c0_i32_0 = arith.constant 0 : i32
    return %arg0, %c0_i32 : i32, i32
  }
  func.func @transform_1(%arg0: i32) -> (i32, i32) {
    %c0_i32 = arith.constant 0 : i32
    %c0_i32_0 = arith.constant 0 : i32
    %c0_i32_1 = arith.constant 0 : i32
    return %c0_i32, %c0_i32_0 : i32, i32
  }
  func.func @transform_2(%arg0: i32) -> (i32, i32) {
    %c0_i32 = arith.constant 0 : i32
    %c0_i32_0 = arith.constant 0 : i32
    %c0_i32_1 = arith.constant 0 : i32
    return %c0_i32, %c0_i32_0 : i32, i32
  }
  func.func @transform_3(%arg0: i32) -> (i32, i32) {
    %c0_i32 = arith.constant 0 : i32
    %c0_i32_0 = arith.constant 0 : i32
    %c0_i32_1 = arith.constant 0 : i32
    return %c0_i32, %c0_i32_0 : i32, i32
  }
  func.func @transform_4(%arg0: i32) -> (i32, i32) {
    %c0_i32 = arith.constant 0 : i32
    %c0_i32_0 = arith.constant 0 : i32
    %c0_i32_1 = arith.constant 0 : i32
    return %c0_i32, %c0_i32_0 : i32, i32
  }
  func.func @transform_5(%arg0: i32) -> (i32, i32) {
    %c0_i32 = arith.constant 0 : i32
    %c0_i32_0 = arith.constant 0 : i32
    %c0_i32_1 = arith.constant 0 : i32
    return %c0_i32, %c0_i32_0 : i32, i32
  }
  func.func @transform_6(%arg0: i32) -> (i32, i32) {
    %c0_i32 = arith.constant 0 : i32
    %c0_i32_0 = arith.constant 0 : i32
    %c0_i32_1 = arith.constant 0 : i32
    return %c0_i32, %c0_i32_0 : i32, i32
  }
  func.func @transform_7(%arg0: i32) -> (i32, i32) {
    %c0_i32 = arith.constant 0 : i32
    %c0_i32_0 = arith.constant 0 : i32
    return %arg0, %c0_i32 : i32, i32
  }
}

</mosaic_0001>

<llo_original>
// kernel: dueling_dqn_forward.1
$region0: #{dueling_dqn_forward.1}
  #allocation0 [shape = 'u32[]', space=smem, size = 0x4, offset = 0x4, fixed_abs, tag = 'smem constant byte address 0x4 - core index']
  #allocation1 [shape = 'u32[144,128]{1,0:T(1,128)}', space=vmem, size = 0x12000, scoped, tag = 'internal scratch']
  %s0 = inlined_call_operand.vmem [shape: bf16[512,16], index: 0, kind: input, shape index: {}]
  %s1 = inlined_call_operand.vmem [shape: bf16[16,128], index: 1, kind: input, shape index: {}]
  %s2 = inlined_call_operand.vmem [shape: f32[1,128], index: 2, kind: input, shape index: {}]
  %s3 = inlined_call_operand.vmem [shape: bf16[128,128], index: 3, kind: input, shape index: {}]
  %s4 = inlined_call_operand.vmem [shape: f32[1,128], index: 4, kind: input, shape index: {}]
  %s5 = inlined_call_operand.vmem [shape: bf16[128,128], index: 5, kind: input, shape index: {}]
  %s6 = inlined_call_operand.vmem [shape: f32[1,128], index: 6, kind: input, shape index: {}]
  %s7 = inlined_call_operand.vmem [shape: f32[512,128], index: 7, kind: output, shape index: {}]
  %s8 = sld [smem:[#allocation0]]
  $region61: #{dueling_dqn_forward.1} parent=0
    _
  %s10 = ssub.s32 1, %s8
  %s11 = scalar_select 0, %s10, %s8
  loop: start=0, step=1, limit=4
  $region2: #{dueling_dqn_forward.1} parent=0 // loop_pre_header
    _
  $region3: #{dueling_dqn_forward.1} parent=0 // loop_header
    %s13 = sphi 0, %s17
    %p14 = scmp.ge.s32.totalorder %s13, 4
    %s23 = sphi 0, %s25
    %s26 = sphi 0, %s23
    %s27 = sphi 0, %s26
    %s43 = sphi 0, %s27
    %s47 = sphi 0, %s47
    %s49 = sphi 0, %s47
    %s50 = sphi 0, %s49
    %s64 = sphi 0, %s50
    %s68 = sphi 0, %s68
    %s70 = sphi 0, %s68
    %s71 = sphi 0, %s70
    %s85 = sphi 0, %s71
    %s89 = sphi 0, %s89
    %s91 = sphi 0, %s89
    %s92 = sphi 0, %s91
    %s106 = sphi 0, %s92
    %s110 = sphi 0, %s110
    %s112 = sphi 0, %s110
    %s113 = sphi 0, %s112
    %s127 = sphi 0, %s113
    %s131 = sphi 0, %s131
    %s133 = sphi 0, %s131
    %s134 = sphi 0, %s133
    %s148 = sphi 0, %s134
    %s152 = sphi 0, %s152
    %s154 = sphi 0, %s152
    %s155 = sphi 0, %s154
    %s169 = sphi 0, %s155
    %s175 = sphi 0, %s177
    %s178 = sphi 0, %s175
    %s179 = sphi 0, %s178
    %s195 = sphi 0, %s179
  $region4: #{dueling_dqn_forward.1} parent=0 // loop_header_branch
    %16 = sbr.rel (%p14) target = $region8
  $region5: #{dueling_dqn_forward.1} parent=0 // loop_body
    %s18 = ssub.s32 %s13, 1
    %s19 = ssub.s32 %s13, 2
    %s20 = sadd.s32 %s13, 1
    %s21 = ssub.s32 %s13, %s20
    %p22 = scmp.eq.s32.totalorder %s21, 0
    %s24 = sadd.s32 %s23, 1
    %s25 = scalar_select %p22, %s23, %s24
    %p28 = pneg %p22
    %p29 = scmp.eq.s32.totalorder %s13, 1
    %p30 = por %p28, %p29
    %p31 = scmp.ne.s32.totalorder %s23, %s26
    %p32 = scmp.eq.s32.totalorder %s13, 0
    %p33 = por %p31, %p32
    %p34 = scmp.ne.s32.totalorder %s23, %s26
    %p35 = scmp.eq.s32.totalorder %s18, 1
    %p36 = por %p34, %p35
    %p37 = scmp.ne.s32.totalorder %s26, %s27
    %p38 = scmp.eq.s32.totalorder %s18, 0
    %p39 = por %p37, %p38
    %p40 = scmp.ne.s32.totalorder %s26, %s27
    %p41 = scmp.eq.s32.totalorder %s19, 1
    %p42 = por %p40, %p41
    %p44 = scmp.ne.s32.totalorder %s27, %s43
    %p45 = scmp.eq.s32.totalorder %s19, 0
    %p46 = por %p44, %p45
    %s48 = sadd.s32 %s47, 1
    %p51 = scmp.eq.s32.totalorder %s13, 1
    %p52 = scmp.ne.s32.totalorder %s47, %s49
    %p53 = scmp.eq.s32.totalorder %s13, 0
    %p54 = por %p52, %p53
    %p55 = scmp.ne.s32.totalorder %s47, %s49
    %p56 = scmp.eq.s32.totalorder %s18, 1
    %p57 = por %p55, %p56
    %p58 = scmp.ne.s32.totalorder %s49, %s50
    %p59 = scmp.eq.s32.totalorder %s18, 0
    %p60 = por %p58, %p59
    %p61 = scmp.ne.s32.totalorder %s49, %s50
    %p62 = scmp.eq.s32.totalorder %s19, 1
    %p63 = por %p61, %p62
    %p65 = scmp.ne.s32.totalorder %s50, %s64
    %p66 = scmp.eq.s32.totalorder %s19, 0
    %p67 = por %p65, %p66
    %s69 = sadd.s32 %s68, 1
    %p72 = scmp.eq.s32.totalorder %s13, 1
    %p73 = scmp.ne.s32.totalorder %s68, %s70
    %p74 = scmp.eq.s32.totalorder %s13, 0
    %p75 = por %p73, %p74
    %p76 = scmp.ne.s32.totalorder %s68, %s70
    %p77 = scmp.eq.s32.totalorder %s18, 1
    %p78 = por %p76, %p77
    %p79 = scmp.ne.s32.totalorder %s70, %s71
    %p80 = scmp.eq.s32.totalorder %s18, 0
    %p81 = por %p79, %p80
    %p82 = scmp.ne.s32.totalorder %s70, %s71
    %p83 = scmp.eq.s32.totalorder %s19, 1
    %p84 = por %p82, %p83
    %p86 = scmp.ne.s32.totalorder %s71, %s85
    %p87 = scmp.eq.s32.totalorder %s19, 0
    %p88 = por %p86, %p87
    %s90 = sadd.s32 %s89, 1
    %p93 = scmp.eq.s32.totalorder %s13, 1
    %p94 = scmp.ne.s32.totalorder %s89, %s91
    %p95 = scmp.eq.s32.totalorder %s13, 0
    %p96 = por %p94, %p95
    %p97 = scmp.ne.s32.totalorder %s89, %s91
    %p98 = scmp.eq.s32.totalorder %s18, 1
    %p99 = por %p97, %p98
    %p100 = scmp.ne.s32.totalorder %s91, %s92
    %p101 = scmp.eq.s32.totalorder %s18, 0
    %p102 = por %p100, %p101
    %p103 = scmp.ne.s32.totalorder %s91, %s92
    %p104 = scmp.eq.s32.totalorder %s19, 1
    %p105 = por %p103, %p104
    %p107 = scmp.ne.s32.totalorder %s92, %s106
    %p108 = scmp.eq.s32.totalorder %s19, 0
    %p109 = por %p107, %p108
    %s111 = sadd.s32 %s110, 1
    %p114 = scmp.eq.s32.totalorder %s13, 1
    %p115 = scmp.ne.s32.totalorder %s110, %s112
    %p116 = scmp.eq.s32.totalorder %s13, 0
    %p117 = por %p115, %p116
    %p118 = scmp.ne.s32.totalorder %s110, %s112
    %p119 = scmp.eq.s32.totalorder %s18, 1
    %p120 = por %p118, %p119
    %p121 = scmp.ne.s32.totalorder %s112, %s113
    %p122 = scmp.eq.s32.totalorder %s18, 0
    %p123 = por %p121, %p122
    %p124 = scmp.ne.s32.totalorder %s112, %s113
    %p125 = scmp.eq.s32.totalorder %s19, 1
    %p126 = por %p124, %p125
    %p128 = scmp.ne.s32.totalorder %s113, %s127
    %p129 = scmp.eq.s32.totalorder %s19, 0
    %p130 = por %p128, %p129
    %s132 = sadd.s32 %s131, 1
    %p135 = scmp.eq.s32.totalorder %s13, 1
    %p136 = scmp.ne.s32.totalorder %s131, %s133
    %p137 = scmp.eq.s32.totalorder %s13, 0
    %p138 = por %p136, %p137
    %p139 = scmp.ne.s32.totalorder %s131, %s133
    %p140 = scmp.eq.s32.totalorder %s18, 1
    %p141 = por %p139, %p140
    %p142 = scmp.ne.s32.totalorder %s133, %s134
    %p143 = scmp.eq.s32.totalorder %s18, 0
    %p144 = por %p142, %p143
    %p145 = scmp.ne.s32.totalorder %s133, %s134
    %p146 = scmp.eq.s32.totalorder %s19, 1
    %p147 = por %p145, %p146
    %p149 = scmp.ne.s32.totalorder %s134, %s148
    %p150 = scmp.eq.s32.totalorder %s19, 0
    %p151 = por %p149, %p150
    %s153 = sadd.s32 %s152, 1
    %p156 = scmp.eq.s32.totalorder %s13, 1
    %p157 = scmp.ne.s32.totalorder %s152, %s154
    %p158 = scmp.eq.s32.totalorder %s13, 0
    %p159 = por %p157, %p158
    %p160 = scmp.ne.s32.totalorder %s152, %s154
    %p161 = scmp.eq.s32.totalorder %s18, 1
    %p162 = por %p160, %p161
    %p163 = scmp.ne.s32.totalorder %s154, %s155
    %p164 = scmp.eq.s32.totalorder %s18, 0
    %p165 = por %p163, %p164
    %p166 = scmp.ne.s32.totalorder %s154, %s155
    %p167 = scmp.eq.s32.totalorder %s19, 1
    %p168 = por %p166, %p167
    %p170 = scmp.ne.s32.totalorder %s155, %s169
    %p171 = scmp.eq.s32.totalorder %s19, 0
    %p172 = por %p170, %p171
    %s173 = ssub.s32 %s13, %s20
    %p174 = scmp.eq.s32.totalorder %s173, 0
    %s176 = sadd.s32 %s175, 1
    %s177 = scalar_select %p174, %s175, %s176
    %p180 = pneg %p174
    %p181 = scmp.eq.s32.totalorder %s13, 1
    %p182 = por %p180, %p181
    %p183 = scmp.ne.s32.totalorder %s175, %s178
    %p184 = scmp.eq.s32.totalorder %s13, 0
    %p185 = por %p183, %p184
    %p186 = scmp.ne.s32.totalorder %s175, %s178
    %p187 = scmp.eq.s32.totalorder %s18, 1
    %p188 = por %p186, %p187
    %p189 = scmp.ne.s32.totalorder %s178, %s179
    %p190 = scmp.eq.s32.totalorder %s18, 0
    %p191 = por %p189, %p190
    %p192 = scmp.ne.s32.totalorder %s178, %s179
    %p193 = scmp.eq.s32.totalorder %s19, 1
    %p194 = por %p192, %p193
    %p196 = scmp.ne.s32.totalorder %s179, %s195
    %p197 = scmp.eq.s32.totalorder %s19, 0
    %p198 = por %p196, %p197
    %p199 = scmp.le.s32.totalorder 1, %s13
    %p200 = scmp.lt.s32.totalorder %s13, 3
    %p201 = pnand %p199, %p200
    %p202 = pneg %p201
    // Predicated region
    $region9: #{dueling_dqn_forward.1} parent=5 // pred_check
      _
    $region10: #{dueling_dqn_forward.1} parent=5 // pred_check_branch
      %204 = sbr.rel (%p201) target = $region12
    $region11: #{dueling_dqn_forward.1} parent=5 // pred_region
      %s205 = ssub.s32 %s13, 1
      // Predicated region
      $region13: #{dueling_dqn_forward.1} parent=11 // pred_check
        %p206 = pneg %p60
      $region14: #{dueling_dqn_forward.1} parent=11 // pred_check_branch
        %208 = sbr.rel (%p206) target = $region16
      $region15: #{dueling_dqn_forward.1} parent=11 // pred_region
        _
      $region16: #{dueling_dqn_forward.1} parent=11 // pred_fallthru
        _
      // Predicated region
      $region17: #{dueling_dqn_forward.1} parent=11 // pred_check
        %p209 = pneg %p81
      $region18: #{dueling_dqn_forward.1} parent=11 // pred_check_branch
        %211 = sbr.rel (%p209) target = $region20
      $region19: #{dueling_dqn_forward.1} parent=11 // pred_region
        _
      $region20: #{dueling_dqn_forward.1} parent=11 // pred_fallthru
        _
      // Predicated region
      $region21: #{dueling_dqn_forward.1} parent=11 // pred_check
        %p212 = pneg %p102
      $region22: #{dueling_dqn_forward.1} parent=11 // pred_check_branch
        %214 = sbr.rel (%p212) target = $region24
      $region23: #{dueling_dqn_forward.1} parent=11 // pred_region
        _
      $region24: #{dueling_dqn_forward.1} parent=11 // pred_fallthru
        _
      // Predicated region
      $region25: #{dueling_dqn_forward.1} parent=11 // pred_check
        %p215 = pneg %p123
      $region26: #{dueling_dqn_forward.1} parent=11 // pred_check_branch
        %217 = sbr.rel (%p215) target = $region28
      $region27: #{dueling_dqn_forward.1} parent=11 // pred_region
        _
      $region28: #{dueling_dqn_forward.1} parent=11 // pred_fallthru
        _
      // Predicated region
      $region29: #{dueling_dqn_forward.1} parent=11 // pred_check
        %p218 = pneg %p144
      $region30: #{dueling_dqn_forward.1} parent=11 // pred_check_branch
        %220 = sbr.rel (%p218) target = $region32
      $region31: #{dueling_dqn_forward.1} parent=11 // pred_region
        _
      $region32: #{dueling_dqn_forward.1} parent=11 // pred_fallthru
        _
      // Predicated region
      $region33: #{dueling_dqn_forward.1} parent=11 // pred_check
        %p221 = pneg %p165
      $region34: #{dueling_dqn_forward.1} parent=11 // pred_check_branch
        %223 = sbr.rel (%p221) target = $region36
      $region35: #{dueling_dqn_forward.1} parent=11 // pred_region
        _
      $region36: #{dueling_dqn_forward.1} parent=11 // pred_fallthru
        _
    $region12: #{dueling_dqn_forward.1} parent=5 // pred_fallthru
      _
    %p224 = scmp.lt.s32.totalorder %s13, 2
    // Predicated region
    $region37: #{dueling_dqn_forward.1} parent=5 // pred_check
      %p225 = pneg %p224
    $region38: #{dueling_dqn_forward.1} parent=5 // pred_check_branch
      %227 = sbr.rel (%p225) target = $region40
    $region39: #{dueling_dqn_forward.1} parent=5 // pred_region
      // Predicated region
      $region41: #{dueling_dqn_forward.1} parent=39 // pred_check
        %p228 = pneg %p33
      $region42: #{dueling_dqn_forward.1} parent=39 // pred_check_branch
        %230 = sbr.rel (%p228) target = $region44
      $region43: #{dueling_dqn_forward.1} parent=39 // pred_region
        %s231 = smul.u32 32, %s13
        %p232 = scmp.lt.s32.totalorder %s231, 63
        %s233 = scalar_select %p232, %s231, 63
        %s234 = smul.addr %s233, 4
        %s235 = scalar_lea.vmem %s0, %s234
        %s236 = smul.u32 32, %s13
      $region44: #{dueling_dqn_forward.1} parent=39 // pred_fallthru
        _
    $region40: #{dueling_dqn_forward.1} parent=5 // pred_fallthru
      _
    %p237 = scmp.le.s32.totalorder 1, %s13
    %p238 = scmp.lt.s32.totalorder %s13, 3
    %p239 = pnand %p237, %p238
    %p240 = pneg %p239
    // Predicated region
    $region45: #{dueling_dqn_forward.1} parent=5 // pred_check
      _
    $region46: #{dueling_dqn_forward.1} parent=5 // pred_check_branch
      %242 = sbr.rel (%p239) target = $region48
    $region47: #{dueling_dqn_forward.1} parent=5 // pred_region
      %s243 = ssub.s32 %s13, 1
      %s244 = smul.u32 32, %s18
      %p245 = scmp.lt.s32.totalorder %s244, 63
      %s246 = scalar_select %p245, %s244, 63
      %s247 = smul.addr %s246, 4
      %s248 = scalar_lea.vmem %s0, %s247
      %p249 = pneg %p39
      %p250 = pneg %p36
      %p251 = pneg %p60
      %p252 = pneg %p57
      %p253 = pneg %p81
      %p254 = pneg %p78
      %p255 = pneg %p102
      %p256 = pneg %p99
      %p257 = pneg %p123
      %p258 = pneg %p120
      %p259 = pneg %p144
      %p260 = pneg %p141
      %p261 = pneg %p165
      %p262 = pneg %p162
      %p263 = pneg %p191
      %p264 = pneg %p188
      %s265 = smul.u32 32, %s18
      %p266 = scmp.lt.s32.totalorder %s265, 63
      %s267 = scalar_select %p266, %s265, 63
      %s268 = smul.addr %s267, 8
      %s269 = scalar_lea.vmem %s7, %s268
      %s270 = smul.u32 32, %s18
      %p271 = scmp.lt.s32.totalorder %s270, 63
      %s272 = scalar_select %p271, %s270, 63
      %s273 = smul.addr %s272, 4
      %s274 = scalar_lea.vmem %s0, %s273
      %s275 = smul.u32 32, %s18
      %s276 = smul.u32 32, %s18
      %p277 = scmp.lt.s32.totalorder %s276, 63
      %s278 = scalar_select %p277, %s276, 63
      %s279 = smul.addr %s278, 8
      %s280 = scalar_lea.vmem %s7, %s279
      %s281 = smul.u32 32, %s18
      %v283 = vld [vmem:[%s274] sm:$0xf]
      %v284 = vld [vmem:[%s274 + $0x4] sm:$0xf]
      %v285 = vld [vmem:[%s274 + $0x8] sm:$0xf]
      %v286 = vld [vmem:[%s274 + $0xc] sm:$0xf]
      %v287 = vld [vmem:[%s274 + $0x10] sm:$0xf]
      %v288 = vld [vmem:[%s274 + $0x14] sm:$0xf]
      %v289 = vld [vmem:[%s274 + $0x18] sm:$0xf]
      %v290 = vld [vmem:[%s274 + $0x1c] sm:$0xf]
      %v291 = vld [vmem:[%s274 + $0x20] sm:$0xf]
      %v292 = vld [vmem:[%s274 + $0x24] sm:$0xf]
      %v293 = vld [vmem:[%s274 + $0x28] sm:$0xf]
      %v294 = vld [vmem:[%s274 + $0x2c] sm:$0xf]
      %v295 = vld [vmem:[%s274 + $0x30] sm:$0xf]
      %v296 = vld [vmem:[%s274 + $0x34] sm:$0xf]
      %v297 = vld [vmem:[%s274 + $0x38] sm:$0xf]
      %v298 = vld [vmem:[%s274 + $0x3c] sm:$0xf]
      %v299 = vld [vmem:[%s274 + $0x40] sm:$0xf]
      %v300 = vld [vmem:[%s274 + $0x44] sm:$0xf]
      %v301 = vld [vmem:[%s274 + $0x48] sm:$0xf]
      %v302 = vld [vmem:[%s274 + $0x4c] sm:$0xf]
      %v303 = vld [vmem:[%s274 + $0x50] sm:$0xf]
      %v304 = vld [vmem:[%s274 + $0x54] sm:$0xf]
      %v305 = vld [vmem:[%s274 + $0x58] sm:$0xf]
      %v306 = vld [vmem:[%s274 + $0x5c] sm:$0xf]
      %v307 = vld [vmem:[%s274 + $0x60] sm:$0xf]
      %v308 = vld [vmem:[%s274 + $0x64] sm:$0xf]
      %v309 = vld [vmem:[%s274 + $0x68] sm:$0xf]
      %v310 = vld [vmem:[%s274 + $0x6c] sm:$0xf]
      %v311 = vld [vmem:[%s274 + $0x70] sm:$0xf]
      %v312 = vld [vmem:[%s274 + $0x74] sm:$0xf]
      %v313 = vld [vmem:[%s274 + $0x78] sm:$0xf]
      %v314 = vld [vmem:[%s274 + $0x7c] sm:$0xf]
      %v315 = vld [vmem:[%s1] sm:$0xf]
      %v316 = vld [vmem:[%s1 + $0x4] sm:$0xf]
      %v317 = vld [vmem:[%s2] sm:$0x1]
      %v319 = vlaneseq
      %v320 = vshrl.u32 %v319, 7
      %v321 = vsub.s32 0, %v320
      %v322 = vrot.slane %v317, %v321
      %v356 = vunpack.c.l.b16 %v283
      %v357 = vunpack.c.l.b16 %v284
      %v358 = vunpack.c.l.b16 %v285
      %v359 = vunpack.c.l.b16 %v286
      %v360 = vunpack.c.l.b16 %v287
      %v361 = vunpack.c.l.b16 %v288
      %v362 = vunpack.c.l.b16 %v289
      %v363 = vunpack.c.l.b16 %v290
      %v364 = vunpack.c.l.b16 %v291
      %v365 = vunpack.c.l.b16 %v292
      %v366 = vunpack.c.l.b16 %v293
      %v367 = vunpack.c.l.b16 %v294
      %v368 = vunpack.c.l.b16 %v295
      %v369 = vunpack.c.l.b16 %v296
      %v370 = vunpack.c.l.b16 %v297
      %v371 = vunpack.c.l.b16 %v298
      %v372 = vunpack.c.l.b16 %v299
      %v373 = vunpack.c.l.b16 %v300
      %v374 = vunpack.c.l.b16 %v301
      %v375 = vunpack.c.l.b16 %v302
      %v376 = vunpack.c.l.b16 %v303
      %v377 = vunpack.c.l.b16 %v304
      %v378 = vunpack.c.l.b16 %v305
      %v379 = vunpack.c.l.b16 %v306
      %v380 = vunpack.c.l.b16 %v307
      %v381 = vunpack.c.l.b16 %v308
      %v382 = vunpack.c.l.b16 %v309
      %v383 = vunpack.c.l.b16 %v310
      %v384 = vunpack.c.l.b16 %v311
      %v385 = vunpack.c.l.b16 %v312
      %v386 = vunpack.c.l.b16 %v313
      %v387 = vunpack.c.l.b16 %v314
      %v388 = vpack.c.b16 %v357, %v356
      %v389 = vpack.c.b16 %v359, %v358
      %v390 = vpack.c.b16 %v361, %v360
      %v391 = vpack.c.b16 %v363, %v362
      %v392 = vpack.c.b16 %v365, %v364
      %v393 = vpack.c.b16 %v367, %v366
      %v394 = vpack.c.b16 %v369, %v368
      %v395 = vpack.c.b16 %v371, %v370
      %v396 = vpack.c.b16 %v373, %v372
      %v397 = vpack.c.b16 %v375, %v374
      %v398 = vpack.c.b16 %v377, %v376
      %v399 = vpack.c.b16 %v379, %v378
      %v400 = vpack.c.b16 %v381, %v380
      %v401 = vpack.c.b16 %v383, %v382
      %v402 = vpack.c.b16 %v385, %v384
      %v403 = vpack.c.b16 %v387, %v386
      %v406 = vunpack.c.l.b16 %v315
      %v407 = vunpack.c.l.b16 %v316
      %v408 = vpack.c.b16 %v407, %v406
      %vm410 = vcmask 130048
      %v412 = vsel %vm410, %v388, 0
      %v415 = vsel %vm410, %v389, 0
      %v418 = vsel %vm410, %v390, 0
      %v421 = vsel %vm410, %v391, 0
      %v424 = vsel %vm410, %v392, 0
      %v427 = vsel %vm410, %v393, 0
      %v430 = vsel %vm410, %v394, 0
      %v433 = vsel %vm410, %v395, 0
      %v436 = vsel %vm410, %v396, 0
      %v439 = vsel %vm410, %v397, 0
      %v442 = vsel %vm410, %v398, 0
      %v445 = vsel %vm410, %v399, 0
      %v448 = vsel %vm410, %v400, 0
      %v451 = vsel %vm410, %v401, 0
      %v454 = vsel %vm410, %v402, 0
      %v457 = vsel %vm410, %v403, 0
      %459 = vmatprep.subr.bf16.mxu0 0
      %460 = vmatpush1.bf16.msra.mxu0 0
      %461 = vmatprep.subr.bf16.mxu0 0
      %462 = vmatpush1.bf16.msra.mxu0 0
      %463 = vmatprep.subr.bf16.mxu0 0
      %464 = vmatpush1.bf16.msra.mxu0 0
      %465 = vmatprep.subr.bf16.mxu0 0
      %466 = vmatpush1.bf16.msra.mxu0 0
      %467 = vmatprep.subr.bf16.mxu0 0
      %468 = vmatpush1.bf16.msra.mxu0 0
      %469 = vmatprep.subr.bf16.mxu0 0
      %470 = vmatpush1.bf16.msra.mxu0 0
      %471 = vmatprep.subr.bf16.mxu0 0
      %472 = vmatpush1.bf16.msra.mxu0 0
      %473 = vmatprep.subr.bf16.mxu0 0
      %474 = vmatpush1.bf16.msra.mxu0 %v408
      %475 = vmatprep.subr.bf16.mxu0 0
      %476 = vmatpush2.bf16.msra.mxu0 0
      %477 = vmatprep.subr.bf16.mxu0 0
      %478 = vmatpush2.bf16.msra.mxu0 0
      %479 = vmatprep.subr.bf16.mxu0 0
      %480 = vmatpush2.bf16.msra.mxu0 0
      %481 = vmatprep.subr.bf16.mxu0 0
      %482 = vmatpush2.bf16.msra.mxu0 0
      %483 = vmatprep.subr.bf16.mxu0 0
      %484 = vmatpush2.bf16.msra.mxu0 0
      %485 = vmatprep.subr.bf16.mxu0 0
      %486 = vmatpush2.bf16.msra.mxu0 0
      %487 = vmatprep.subr.bf16.mxu0 0
      %488 = vmatpush2.bf16.msra.mxu0 0
      %489 = vmatprep.subr.bf16.mxu0 0
      %490 = vmatpush2.bf16.msra.mxu0 0
      %491 = vmatprep.mubr.bf16.mxu0 0
      %492 = vmatmul.mubr.bf16.gmra.mxu0 %v412
      %v493 = vpop.f32.mrf.mxu0
      %v494 = vadd.f32 %v322, %v493
      %v495 = vpop.f32.mrf.mxu0
      %v496 = vpop.f32.mrf.mxu0
      %v497 = vadd.f32 %v322, %v496
      %v498 = vpop.f32.mrf.mxu0
      %499 = vmatprep.mubr.bf16.mxu0 0
      %500 = vmatmul.mubr.bf16.gmra.mxu0 %v415
      %v501 = vpop.f32.mrf.mxu0
      %v502 = vadd.f32 %v322, %v501
      %v503 = vpop.f32.mrf.mxu0
      %v504 = vpop.f32.mrf.mxu0
      %v505 = vadd.f32 %v322, %v504
      %v506 = vpop.f32.mrf.mxu0
      %507 = vmatprep.mubr.bf16.mxu0 0
      %508 = vmatmul.mubr.bf16.gmra.mxu0 %v418
      %v509 = vpop.f32.mrf.mxu0
      %v510 = vadd.f32 %v322, %v509
      %v511 = vpop.f32.mrf.mxu0
      %v512 = vpop.f32.mrf.mxu0
      %v513 = vadd.f32 %v322, %v512
      %v514 = vpop.f32.mrf.mxu0
      %515 = vmatprep.mubr.bf16.mxu0 0
      %516 = vmatmul.mubr.bf16.gmra.mxu0 %v421
      %v517 = vpop.f32.mrf.mxu0
      %v518 = vadd.f32 %v322, %v517
      %v519 = vpop.f32.mrf.mxu0
      %v520 = vpop.f32.mrf.mxu0
      %v521 = vadd.f32 %v322, %v520
      %v522 = vpop.f32.mrf.mxu0
      %523 = vmatprep.mubr.bf16.mxu0 0
      %524 = vmatmul.mubr.bf16.gmra.mxu0 %v424
      %v525 = vpop.f32.mrf.mxu0
      %v526 = vadd.f32 %v322, %v525
      %v527 = vpop.f32.mrf.mxu0
      %v528 = vpop.f32.mrf.mxu0
      %v529 = vadd.f32 %v322, %v528
      %v530 = vpop.f32.mrf.mxu0
      %531 = vmatprep.mubr.bf16.mxu0 0
      %532 = vmatmul.mubr.bf16.gmra.mxu0 %v427
      %v533 = vpop.f32.mrf.mxu0
      %v534 = vadd.f32 %v322, %v533
      %v535 = vpop.f32.mrf.mxu0
      %v536 = vpop.f32.mrf.mxu0
      %v537 = vadd.f32 %v322, %v536
      %v538 = vpop.f32.mrf.mxu0
      %539 = vmatprep.mubr.bf16.mxu0 0
      %540 = vmatmul.mubr.bf16.gmra.mxu0 %v430
      %v541 = vpop.f32.mrf.mxu0
      %v542 = vadd.f32 %v322, %v541
      %v543 = vpop.f32.mrf.mxu0
      %v544 = vpop.f32.mrf.mxu0
      %v545 = vadd.f32 %v322, %v544
      %v546 = vpop.f32.mrf.mxu0
      %547 = vmatprep.mubr.bf16.mxu0 0
      %548 = vmatmul.mubr.bf16.gmra.mxu0 %v433
      %v549 = vpop.f32.mrf.mxu0
      %v550 = vadd.f32 %v322, %v549
      %v551 = vpop.f32.mrf.mxu0
      %v552 = vpop.f32.mrf.mxu0
      %v553 = vadd.f32 %v322, %v552
      %v554 = vpop.f32.mrf.mxu0
      %555 = vmatprep.mubr.bf16.mxu0 0
      %556 = vmatmul.mubr.bf16.gmra.mxu0 %v436
      %v557 = vpop.f32.mrf.mxu0
      %v558 = vadd.f32 %v322, %v557
      %v559 = vpop.f32.mrf.mxu0
      %v560 = vpop.f32.mrf.mxu0
      %v561 = vadd.f32 %v322, %v560
      %v562 = vpop.f32.mrf.mxu0
      %563 = vmatprep.mubr.bf16.mxu0 0
      %564 = vmatmul.mubr.bf16.gmra.mxu0 %v439
      %v565 = vpop.f32.mrf.mxu0
      %v566 = vadd.f32 %v322, %v565
      %v567 = vpop.f32.mrf.mxu0
      %v568 = vpop.f32.mrf.mxu0
      %v569 = vadd.f32 %v322, %v568
      %v570 = vpop.f32.mrf.mxu0
      %571 = vmatprep.mubr.bf16.mxu0 0
      %572 = vmatmul.mubr.bf16.gmra.mxu0 %v442
      %v573 = vpop.f32.mrf.mxu0
      %v574 = vadd.f32 %v322, %v573
      %v575 = vpop.f32.mrf.mxu0
      %v576 = vpop.f32.mrf.mxu0
      %v577 = vadd.f32 %v322, %v576
      %v578 = vpop.f32.mrf.mxu0
      %579 = vmatprep.mubr.bf16.mxu0 0
      %580 = vmatmul.mubr.bf16.gmra.mxu0 %v445
      %v581 = vpop.f32.mrf.mxu0
      %v582 = vadd.f32 %v322, %v581
      %v583 = vpop.f32.mrf.mxu0
      %v584 = vpop.f32.mrf.mxu0
      %v585 = vadd.f32 %v322, %v584
      %v586 = vpop.f32.mrf.mxu0
      %587 = vmatprep.mubr.bf16.mxu0 0
      %588 = vmatmul.mubr.bf16.gmra.mxu0 %v448
      %v589 = vpop.f32.mrf.mxu0
      %v590 = vadd.f32 %v322, %v589
      %v591 = vpop.f32.mrf.mxu0
      %v592 = vpop.f32.mrf.mxu0
      %v593 = vadd.f32 %v322, %v592
      %v594 = vpop.f32.mrf.mxu0
      %595 = vmatprep.mubr.bf16.mxu0 0
      %596 = vmatmul.mubr.bf16.gmra.mxu0 %v451
      %v597 = vpop.f32.mrf.mxu0
      %v598 = vadd.f32 %v322, %v597
      %v599 = vpop.f32.mrf.mxu0
      %v600 = vpop.f32.mrf.mxu0
      %v601 = vadd.f32 %v322, %v600
      %v602 = vpop.f32.mrf.mxu0
      %603 = vmatprep.mubr.bf16.mxu0 0
      %604 = vmatmul.mubr.bf16.gmra.mxu0 %v454
      %v605 = vpop.f32.mrf.mxu0
      %v606 = vadd.f32 %v322, %v605
      %v607 = vpop.f32.mrf.mxu0
      %v608 = vpop.f32.mrf.mxu0
      %v609 = vadd.f32 %v322, %v608
      %v610 = vpop.f32.mrf.mxu0
      %611 = vmatprep.mubr.bf16.mxu0 0
      %612 = vmatmul.mubr.bf16.gmra.mxu0 %v457
      %v613 = vpop.f32.mrf.mxu0
      %v614 = vadd.f32 %v322, %v613
      %v615 = vpop.f32.mrf.mxu0
      %v616 = vpop.f32.mrf.mxu0
      %v617 = vadd.f32 %v322, %v616
      %v618 = vpop.f32.mrf.mxu0
      %619 = vdwg.mxu0
      %v620 = vmax.f32 %v494, 0.0
      %v621 = vmax.f32 %v497, 0.0
      %v622 = vmax.f32 %v502, 0.0
      %v623 = vmax.f32 %v505, 0.0
      %v624 = vmax.f32 %v510, 0.0
      %v625 = vmax.f32 %v513, 0.0
      %v626 = vmax.f32 %v518, 0.0
      %v627 = vmax.f32 %v521, 0.0
      %v628 = vmax.f32 %v526, 0.0
      %v629 = vmax.f32 %v529, 0.0
      %v630 = vmax.f32 %v534, 0.0
      %v631 = vmax.f32 %v537, 0.0
      %v632 = vmax.f32 %v542, 0.0
      %v633 = vmax.f32 %v545, 0.0
      %v634 = vmax.f32 %v550, 0.0
      %v635 = vmax.f32 %v553, 0.0
      %v636 = vmax.f32 %v558, 0.0
      %v637 = vmax.f32 %v561, 0.0
      %v638 = vmax.f32 %v566, 0.0
      %v639 = vmax.f32 %v569, 0.0
      %v640 = vmax.f32 %v574, 0.0
      %v641 = vmax.f32 %v577, 0.0
      %v642 = vmax.f32 %v582, 0.0
      %v643 = vmax.f32 %v585, 0.0
      %v644 = vmax.f32 %v590, 0.0
      %v645 = vmax.f32 %v593, 0.0
      %v646 = vmax.f32 %v598, 0.0
      %v647 = vmax.f32 %v601, 0.0
      %v648 = vmax.f32 %v606, 0.0
      %v649 = vmax.f32 %v609, 0.0
      %v650 = vmax.f32 %v614, 0.0
      %v651 = vmax.f32 %v617, 0.0
      %v652 = vpack.c.bf16 %v621, %v620
      %v653 = vpack.c.bf16 %v623, %v622
      %v654 = vpack.c.bf16 %v625, %v624
      %v655 = vpack.c.bf16 %v627, %v626
      %v656 = vpack.c.bf16 %v629, %v628
      %v657 = vpack.c.bf16 %v631, %v630
      %v658 = vpack.c.bf16 %v633, %v632
      %v659 = vpack.c.bf16 %v635, %v634
      %v660 = vpack.c.bf16 %v637, %v636
      %v661 = vpack.c.bf16 %v639, %v638
      %v662 = vpack.c.bf16 %v641, %v640
      %v663 = vpack.c.bf16 %v643, %v642
      %v664 = vpack.c.bf16 %v645, %v644
      %v665 = vpack.c.bf16 %v647, %v646
      %v666 = vpack.c.bf16 %v649, %v648
      %v667 = vpack.c.bf16 %v651, %v650
      %v668 = vld [vmem:[%s3] sm:$0xf]
      %v669 = vld [vmem:[%s3 + $0x4] sm:$0xf]
      %v670 = vld [vmem:[%s3 + $0x8] sm:$0xf]
      %v671 = vld [vmem:[%s3 + $0xc] sm:$0xf]
      %v672 = vld [vmem:[%s3 + $0x10] sm:$0xf]
      %v673 = vld [vmem:[%s3 + $0x14] sm:$0xf]
      %v674 = vld [vmem:[%s3 + $0x18] sm:$0xf]
      %v675 = vld [vmem:[%s3 + $0x1c] sm:$0xf]
      %v676 = vld [vmem:[%s3 + $0x20] sm:$0xf]
      %v677 = vld [vmem:[%s3 + $0x24] sm:$0xf]
      %v678 = vld [vmem:[%s3 + $0x28] sm:$0xf]
      %v679 = vld [vmem:[%s3 + $0x2c] sm:$0xf]
      %v680 = vld [vmem:[%s3 + $0x30] sm:$0xf]
      %v681 = vld [vmem:[%s3 + $0x34] sm:$0xf]
      %v682 = vld [vmem:[%s3 + $0x38] sm:$0xf]
      %v683 = vld [vmem:[%s3 + $0x3c] sm:$0xf]
      %v684 = vld [vmem:[%s4] sm:$0x1]
      %v686 = vlaneseq
      %v687 = vshrl.u32 %v686, 7
      %v688 = vsub.s32 0, %v687
      %v689 = vrot.slane %v684, %v688
      %v707 = vunpack.c.l.b16 %v668
      %v708 = vunpack.c.l.b16 %v669
      %v709 = vunpack.c.l.b16 %v670
      %v710 = vunpack.c.l.b16 %v671
      %v711 = vunpack.c.l.b16 %v672
      %v712 = vunpack.c.l.b16 %v673
      %v713 = vunpack.c.l.b16 %v674
      %v714 = vunpack.c.l.b16 %v675
      %v715 = vunpack.c.l.b16 %v676
      %v716 = vunpack.c.l.b16 %v677
      %v717 = vunpack.c.l.b16 %v678
      %v718 = vunpack.c.l.b16 %v679
      %v719 = vunpack.c.l.b16 %v680
      %v720 = vunpack.c.l.b16 %v681
      %v721 = vunpack.c.l.b16 %v682
      %v722 = vunpack.c.l.b16 %v683
      %v723 = vpack.c.b16 %v708, %v707
      %v724 = vpack.c.b16 %v710, %v709
      %v725 = vpack.c.b16 %v712, %v711
      %v726 = vpack.c.b16 %v714, %v713
      %v727 = vpack.c.b16 %v716, %v715
      %v728 = vpack.c.b16 %v718, %v717
      %v729 = vpack.c.b16 %v720, %v719
      %v730 = vpack.c.b16 %v722, %v721
      %739 = vmatprep.subr.bf16.mxu0 0
      %740 = vmatpush1.bf16.msra.mxu0 %v730
      %741 = vmatprep.subr.bf16.mxu0 0
      %742 = vmatpush1.bf16.msra.mxu0 %v729
      %743 = vmatprep.subr.bf16.mxu0 0
      %744 = vmatpush1.bf16.msra.mxu0 %v728
      %745 = vmatprep.subr.bf16.mxu0 0
      %746 = vmatpush1.bf16.msra.mxu0 %v727
      %747 = vmatprep.subr.bf16.mxu0 0
      %748 = vmatpush1.bf16.msra.mxu0 %v726
      %749 = vmatprep.subr.bf16.mxu0 0
      %750 = vmatpush1.bf16.msra.mxu0 %v725
      %751 = vmatprep.subr.bf16.mxu0 0
      %752 = vmatpush1.bf16.msra.mxu0 %v724
      %753 = vmatprep.subr.bf16.mxu0 0
      %754 = vmatpush1.bf16.msra.mxu0 %v723
      %755 = vmatprep.subr.bf16.mxu0 0
      %756 = vmatpush2.bf16.msra.mxu0 0
      %757 = vmatprep.subr.bf16.mxu0 0
      %758 = vmatpush2.bf16.msra.mxu0 0
      %759 = vmatprep.subr.bf16.mxu0 0
      %760 = vmatpush2.bf16.msra.mxu0 0
      %761 = vmatprep.subr.bf16.mxu0 0
      %762 = vmatpush2.bf16.msra.mxu0 0
      %763 = vmatprep.subr.bf16.mxu0 0
      %764 = vmatpush2.bf16.msra.mxu0 0
      %765 = vmatprep.subr.bf16.mxu0 0
      %766 = vmatpush2.bf16.msra.mxu0 0
      %767 = vmatprep.subr.bf16.mxu0 0
      %768 = vmatpush2.bf16.msra.mxu0 0
      %769 = vmatprep.subr.bf16.mxu0 0
      %770 = vmatpush2.bf16.msra.mxu0 0
      %771 = vmatprep.mubr.bf16.mxu0 0
      %772 = vmatmul.mubr.bf16.gmra.mxu0 %v652
      %v773 = vpop.f32.mrf.mxu0
      %v774 = vadd.f32 %v689, %v773
      %v775 = vpop.f32.mrf.mxu0
      %v776 = vpop.f32.mrf.mxu0
      %v777 = vadd.f32 %v689, %v776
      %v778 = vpop.f32.mrf.mxu0
      %779 = vmatprep.mubr.bf16.mxu0 0
      %780 = vmatmul.mubr.bf16.gmra.mxu0 %v653
      %v781 = vpop.f32.mrf.mxu0
      %v782 = vadd.f32 %v689, %v781
      %v783 = vpop.f32.mrf.mxu0
      %v784 = vpop.f32.mrf.mxu0
      %v785 = vadd.f32 %v689, %v784
      %v786 = vpop.f32.mrf.mxu0
      %787 = vmatprep.mubr.bf16.mxu0 0
      %788 = vmatmul.mubr.bf16.gmra.mxu0 %v654
      %v789 = vpop.f32.mrf.mxu0
      %v790 = vadd.f32 %v689, %v789
      %v791 = vpop.f32.mrf.mxu0
      %v792 = vpop.f32.mrf.mxu0
      %v793 = vadd.f32 %v689, %v792
      %v794 = vpop.f32.mrf.mxu0
      %795 = vmatprep.mubr.bf16.mxu0 0
      %796 = vmatmul.mubr.bf16.gmra.mxu0 %v655
      %v797 = vpop.f32.mrf.mxu0
      %v798 = vadd.f32 %v689, %v797
      %v799 = vpop.f32.mrf.mxu0
      %v800 = vpop.f32.mrf.mxu0
      %v801 = vadd.f32 %v689, %v800
      %v802 = vpop.f32.mrf.mxu0
      %803 = vmatprep.mubr.bf16.mxu0 0
      %804 = vmatmul.mubr.bf16.gmra.mxu0 %v656
      %v805 = vpop.f32.mrf.mxu0
      %v806 = vadd.f32 %v689, %v805
      %v807 = vpop.f32.mrf.mxu0
      %v808 = vpop.f32.mrf.mxu0
      %v809 = vadd.f32 %v689, %v808
      %v810 = vpop.f32.mrf.mxu0
      %811 = vmatprep.mubr.bf16.mxu0 0
      %812 = vmatmul.mubr.bf16.gmra.mxu0 %v657
      %v813 = vpop.f32.mrf.mxu0
      %v814 = vadd.f32 %v689, %v813
      %v815 = vpop.f32.mrf.mxu0
      %v816 = vpop.f32.mrf.mxu0
      %v817 = vadd.f32 %v689, %v816
      %v818 = vpop.f32.mrf.mxu0
      %819 = vmatprep.mubr.bf16.mxu0 0
      %820 = vmatmul.mubr.bf16.gmra.mxu0 %v658
      %v821 = vpop.f32.mrf.mxu0
      %v822 = vadd.f32 %v689, %v821
      %v823 = vpop.f32.mrf.mxu0
      %v824 = vpop.f32.mrf.mxu0
      %v825 = vadd.f32 %v689, %v824
      %v826 = vpop.f32.mrf.mxu0
      %827 = vmatprep.mubr.bf16.mxu0 0
      %828 = vmatmul.mubr.bf16.gmra.mxu0 %v659
      %v829 = vpop.f32.mrf.mxu0
      %v830 = vadd.f32 %v689, %v829
      %v831 = vpop.f32.mrf.mxu0
      %v832 = vpop.f32.mrf.mxu0
      %v833 = vadd.f32 %v689, %v832
      %v834 = vpop.f32.mrf.mxu0
      %835 = vmatprep.mubr.bf16.mxu0 0
      %836 = vmatmul.mubr.bf16.gmra.mxu0 %v660
      %v837 = vpop.f32.mrf.mxu0
      %v838 = vadd.f32 %v689, %v837
      %v839 = vpop.f32.mrf.mxu0
      %v840 = vpop.f32.mrf.mxu0
      %v841 = vadd.f32 %v689, %v840
      %v842 = vpop.f32.mrf.mxu0
      %843 = vmatprep.mubr.bf16.mxu0 0
      %844 = vmatmul.mubr.bf16.gmra.mxu0 %v661
      %v845 = vpop.f32.mrf.mxu0
      %v846 = vadd.f32 %v689, %v845
      %v847 = vpop.f32.mrf.mxu0
      %v848 = vpop.f32.mrf.mxu0
      %v849 = vadd.f32 %v689, %v848
      %v850 = vpop.f32.mrf.mxu0
      %851 = vmatprep.mubr.bf16.mxu0 0
      %852 = vmatmul.mubr.bf16.gmra.mxu0 %v662
      %v853 = vpop.f32.mrf.mxu0
      %v854 = vadd.f32 %v689, %v853
      %v855 = vpop.f32.mrf.mxu0
      %v856 = vpop.f32.mrf.mxu0
      %v857 = vadd.f32 %v689, %v856
      %v858 = vpop.f32.mrf.mxu0
      %859 = vmatprep.mubr.bf16.mxu0 0
      %860 = vmatmul.mubr.bf16.gmra.mxu0 %v663
      %v861 = vpop.f32.mrf.mxu0
      %v862 = vadd.f32 %v689, %v861
      %v863 = vpop.f32.mrf.mxu0
      %v864 = vpop.f32.mrf.mxu0
      %v865 = vadd.f32 %v689, %v864
      %v866 = vpop.f32.mrf.mxu0
      %867 = vmatprep.mubr.bf16.mxu0 0
      %868 = vmatmul.mubr.bf16.gmra.mxu0 %v664
      %v869 = vpop.f32.mrf.mxu0
      %v870 = vadd.f32 %v689, %v869
      %v871 = vpop.f32.mrf.mxu0
      %v872 = vpop.f32.mrf.mxu0
      %v873 = vadd.f32 %v689, %v872
      %v874 = vpop.f32.mrf.mxu0
      %875 = vmatprep.mubr.bf16.mxu0 0
      %876 = vmatmul.mubr.bf16.gmra.mxu0 %v665
      %v877 = vpop.f32.mrf.mxu0
      %v878 = vadd.f32 %v689, %v877
      %v879 = vpop.f32.mrf.mxu0
      %v880 = vpop.f32.mrf.mxu0
      %v881 = vadd.f32 %v689, %v880
      %v882 = vpop.f32.mrf.mxu0
      %883 = vmatprep.mubr.bf16.mxu0 0
      %884 = vmatmul.mubr.bf16.gmra.mxu0 %v666
      %v885 = vpop.f32.mrf.mxu0
      %v886 = vadd.f32 %v689, %v885
      %v887 = vpop.f32.mrf.mxu0
      %v888 = vpop.f32.mrf.mxu0
      %v889 = vadd.f32 %v689, %v888
      %v890 = vpop.f32.mrf.mxu0
      %891 = vmatprep.mubr.bf16.mxu0 0
      %892 = vmatmul.mubr.bf16.gmra.mxu0 %v667
      %v893 = vpop.f32.mrf.mxu0
      %v894 = vadd.f32 %v689, %v893
      %v895 = vpop.f32.mrf.mxu0
      %v896 = vpop.f32.mrf.mxu0
      %v897 = vadd.f32 %v689, %v896
      %v898 = vpop.f32.mrf.mxu0
      %899 = vdwg.mxu0
      %v900 = vtanh.pop %v774
      %v901 = vtanh.pop %v777
      %v902 = vtanh.pop %v782
      %v903 = vtanh.pop %v785
      %v904 = vtanh.pop %v790
      %v905 = vtanh.pop %v793
      %v906 = vtanh.pop %v798
      %v907 = vtanh.pop %v801
      %v908 = vtanh.pop %v806
      %v909 = vtanh.pop %v809
      %v910 = vtanh.pop %v814
      %v911 = vtanh.pop %v817
      %v912 = vtanh.pop %v822
      %v913 = vtanh.pop %v825
      %v914 = vtanh.pop %v830
      %v915 = vtanh.pop %v833
      %v916 = vtanh.pop %v838
      %v917 = vtanh.pop %v841
      %v918 = vtanh.pop %v846
      %v919 = vtanh.pop %v849
      %v920 = vtanh.pop %v854
      %v921 = vtanh.pop %v857
      %v922 = vtanh.pop %v862
      %v923 = vtanh.pop %v865
      %v924 = vtanh.pop %v870
      %v925 = vtanh.pop %v873
      %v926 = vtanh.pop %v878
      %v927 = vtanh.pop %v881
      %v928 = vtanh.pop %v886
      %v929 = vtanh.pop %v889
      %v930 = vtanh.pop %v894
      %v931 = vtanh.pop %v897
      %v932 = vpack.c.bf16 %v901, %v900
      %v933 = vpack.c.bf16 %v903, %v902
      %v934 = vpack.c.bf16 %v905, %v904
      %v935 = vpack.c.bf16 %v907, %v906
      %v936 = vpack.c.bf16 %v909, %v908
      %v937 = vpack.c.bf16 %v911, %v910
      %v938 = vpack.c.bf16 %v913, %v912
      %v939 = vpack.c.bf16 %v915, %v914
      %v940 = vpack.c.bf16 %v917, %v916
      %v941 = vpack.c.bf16 %v919, %v918
      %v942 = vpack.c.bf16 %v921, %v920
      %v943 = vpack.c.bf16 %v923, %v922
      %v944 = vpack.c.bf16 %v925, %v924
      %v945 = vpack.c.bf16 %v927, %v926
      %v946 = vpack.c.bf16 %v929, %v928
      %v947 = vpack.c.bf16 %v931, %v930
      %v948 = vld [vmem:[%s5] sm:$0xf]
      %v949 = vld [vmem:[%s5 + $0x4] sm:$0xf]
      %v950 = vld [vmem:[%s5 + $0x8] sm:$0xf]
      %v951 = vld [vmem:[%s5 + $0xc] sm:$0xf]
      %v952 = vld [vmem:[%s5 + $0x10] sm:$0xf]
      %v953 = vld [vmem:[%s5 + $0x14] sm:$0xf]
      %v954 = vld [vmem:[%s5 + $0x18] sm:$0xf]
      %v955 = vld [vmem:[%s5 + $0x1c] sm:$0xf]
      %v956 = vld [vmem:[%s5 + $0x20] sm:$0xf]
      %v957 = vld [vmem:[%s5 + $0x24] sm:$0xf]
      %v958 = vld [vmem:[%s5 + $0x28] sm:$0xf]
      %v959 = vld [vmem:[%s5 + $0x2c] sm:$0xf]
      %v960 = vld [vmem:[%s5 + $0x30] sm:$0xf]
      %v961 = vld [vmem:[%s5 + $0x34] sm:$0xf]
      %v962 = vld [vmem:[%s5 + $0x38] sm:$0xf]
      %v963 = vld [vmem:[%s5 + $0x3c] sm:$0xf]
      %v964 = vld [vmem:[%s6] sm:$0x1]
      %v966 = vlaneseq
      %v967 = vshrl.u32 %v966, 7
      %v968 = vsub.s32 0, %v967
      %v969 = vrot.slane %v964, %v968
      %v987 = vunpack.c.l.b16 %v948
      %v988 = vunpack.c.l.b16 %v949
      %v989 = vunpack.c.l.b16 %v950
      %v990 = vunpack.c.l.b16 %v951
      %v991 = vunpack.c.l.b16 %v952
      %v992 = vunpack.c.l.b16 %v953
      %v993 = vunpack.c.l.b16 %v954
      %v994 = vunpack.c.l.b16 %v955
      %v995 = vunpack.c.l.b16 %v956
      %v996 = vunpack.c.l.b16 %v957
      %v997 = vunpack.c.l.b16 %v958
      %v998 = vunpack.c.l.b16 %v959
      %v999 = vunpack.c.l.b16 %v960
      %v1000 = vunpack.c.l.b16 %v961
      %v1001 = vunpack.c.l.b16 %v962
      %v1002 = vunpack.c.l.b16 %v963
      %v1003 = vpack.c.b16 %v988, %v987
      %v1004 = vpack.c.b16 %v990, %v989
      %v1005 = vpack.c.b16 %v992, %v991
      %v1006 = vpack.c.b16 %v994, %v993
      %v1007 = vpack.c.b16 %v996, %v995
      %v1008 = vpack.c.b16 %v998, %v997
      %v1009 = vpack.c.b16 %v1000, %v999
      %v1010 = vpack.c.b16 %v1002, %v1001
      %1019 = vmatprep.subr.bf16.mxu0 0
      %1020 = vmatpush1.bf16.msra.mxu0 %v1010
      %1021 = vmatprep.subr.bf16.mxu0 0
      %1022 = vmatpush1.bf16.msra.mxu0 %v1009
      %1023 = vmatprep.subr.bf16.mxu0 0
      %1024 = vmatpush1.bf16.msra.mxu0 %v1008
      %1025 = vmatprep.subr.bf16.mxu0 0
      %1026 = vmatpush1.bf16.msra.mxu0 %v1007
      %1027 = vmatprep.subr.bf16.mxu0 0
      %1028 = vmatpush1.bf16.msra.mxu0 %v1006
      %1029 = vmatprep.subr.bf16.mxu0 0
      %1030 = vmatpush1.bf16.msra.mxu0 %v1005
      %1031 = vmatprep.subr.bf16.mxu0 0
      %1032 = vmatpush1.bf16.msra.mxu0 %v1004
      %1033 = vmatprep.subr.bf16.mxu0 0
      %1034 = vmatpush1.bf16.msra.mxu0 %v1003
      %1035 = vmatprep.subr.bf16.mxu0 0
      %1036 = vmatpush2.bf16.msra.mxu0 0
      %1037 = vmatprep.subr.bf16.mxu0 0
      %1038 = vmatpush2.bf16.msra.mxu0 0
      %1039 = vmatprep.subr.bf16.mxu0 0
      %1040 = vmatpush2.bf16.msra.mxu0 0
      %1041 = vmatprep.subr.bf16.mxu0 0
      %1042 = vmatpush2.bf16.msra.mxu0 0
      %1043 = vmatprep.subr.bf16.mxu0 0
      %1044 = vmatpush2.bf16.msra.mxu0 0
      %1045 = vmatprep.subr.bf16.mxu0 0
      %1046 = vmatpush2.bf16.msra.mxu0 0
      %1047 = vmatprep.subr.bf16.mxu0 0
      %1048 = vmatpush2.bf16.msra.mxu0 0
      %1049 = vmatprep.subr.bf16.mxu0 0
      %1050 = vmatpush2.bf16.msra.mxu0 0
      %1051 = vmatprep.mubr.bf16.mxu0 0
      %1052 = vmatmul.mubr.bf16.gmra.mxu0 %v932
      %v1053 = vpop.f32.mrf.mxu0
      %v1054 = vadd.f32 %v969, %v1053
      %v1055 = vpop.f32.mrf.mxu0
      %v1056 = vpop.f32.mrf.mxu0
      %v1057 = vadd.f32 %v969, %v1056
      %v1058 = vpop.f32.mrf.mxu0
      %1059 = vmatprep.mubr.bf16.mxu0 0
      %1060 = vmatmul.mubr.bf16.gmra.mxu0 %v933
      %v1061 = vpop.f32.mrf.mxu0
      %v1062 = vadd.f32 %v969, %v1061
      %v1063 = vpop.f32.mrf.mxu0
      %v1064 = vpop.f32.mrf.mxu0
      %v1065 = vadd.f32 %v969, %v1064
      %v1066 = vpop.f32.mrf.mxu0
      %1067 = vmatprep.mubr.bf16.mxu0 0
      %1068 = vmatmul.mubr.bf16.gmra.mxu0 %v934
      %v1069 = vpop.f32.mrf.mxu0
      %v1070 = vadd.f32 %v969, %v1069
      %v1071 = vpop.f32.mrf.mxu0
      %v1072 = vpop.f32.mrf.mxu0
      %v1073 = vadd.f32 %v969, %v1072
      %v1074 = vpop.f32.mrf.mxu0
      %1075 = vmatprep.mubr.bf16.mxu0 0
      %1076 = vmatmul.mubr.bf16.gmra.mxu0 %v935
      %v1077 = vpop.f32.mrf.mxu0
      %v1078 = vadd.f32 %v969, %v1077
      %v1079 = vpop.f32.mrf.mxu0
      %v1080 = vpop.f32.mrf.mxu0
      %v1081 = vadd.f32 %v969, %v1080
      %v1082 = vpop.f32.mrf.mxu0
      %1083 = vmatprep.mubr.bf16.mxu0 0
      %1084 = vmatmul.mubr.bf16.gmra.mxu0 %v936
      %v1085 = vpop.f32.mrf.mxu0
      %v1086 = vadd.f32 %v969, %v1085
      %v1087 = vpop.f32.mrf.mxu0
      %v1088 = vpop.f32.mrf.mxu0
      %v1089 = vadd.f32 %v969, %v1088
      %v1090 = vpop.f32.mrf.mxu0
      %1091 = vmatprep.mubr.bf16.mxu0 0
      %1092 = vmatmul.mubr.bf16.gmra.mxu0 %v937
      %v1093 = vpop.f32.mrf.mxu0
      %v1094 = vadd.f32 %v969, %v1093
      %v1095 = vpop.f32.mrf.mxu0
      %v1096 = vpop.f32.mrf.mxu0
      %v1097 = vadd.f32 %v969, %v1096
      %v1098 = vpop.f32.mrf.mxu0
      %1099 = vmatprep.mubr.bf16.mxu0 0
      %1100 = vmatmul.mubr.bf16.gmra.mxu0 %v938
      %v1101 = vpop.f32.mrf.mxu0
      %v1102 = vadd.f32 %v969, %v1101
      %v1103 = vpop.f32.mrf.mxu0
      %v1104 = vpop.f32.mrf.mxu0
      %v1105 = vadd.f32 %v969, %v1104
      %v1106 = vpop.f32.mrf.mxu0
      %1107 = vmatprep.mubr.bf16.mxu0 0
      %1108 = vmatmul.mubr.bf16.gmra.mxu0 %v939
      %v1109 = vpop.f32.mrf.mxu0
      %v1110 = vadd.f32 %v969, %v1109
      %v1111 = vpop.f32.mrf.mxu0
      %v1112 = vpop.f32.mrf.mxu0
      %v1113 = vadd.f32 %v969, %v1112
      %v1114 = vpop.f32.mrf.mxu0
      %1115 = vmatprep.mubr.bf16.mxu0 0
      %1116 = vmatmul.mubr.bf16.gmra.mxu0 %v940
      %v1117 = vpop.f32.mrf.mxu0
      %v1118 = vadd.f32 %v969, %v1117
      %v1119 = vpop.f32.mrf.mxu0
      %v1120 = vpop.f32.mrf.mxu0
      %v1121 = vadd.f32 %v969, %v1120
      %v1122 = vpop.f32.mrf.mxu0
      %1123 = vmatprep.mubr.bf16.mxu0 0
      %1124 = vmatmul.mubr.bf16.gmra.mxu0 %v941
      %v1125 = vpop.f32.mrf.mxu0
      %v1126 = vadd.f32 %v969, %v1125
      %v1127 = vpop.f32.mrf.mxu0
      %v1128 = vpop.f32.mrf.mxu0
      %v1129 = vadd.f32 %v969, %v1128
      %v1130 = vpop.f32.mrf.mxu0
      %1131 = vmatprep.mubr.bf16.mxu0 0
      %1132 = vmatmul.mubr.bf16.gmra.mxu0 %v942
      %v1133 = vpop.f32.mrf.mxu0
      %v1134 = vadd.f32 %v969, %v1133
      %v1135 = vpop.f32.mrf.mxu0
      %v1136 = vpop.f32.mrf.mxu0
      %v1137 = vadd.f32 %v969, %v1136
      %v1138 = vpop.f32.mrf.mxu0
      %1139 = vmatprep.mubr.bf16.mxu0 0
      %1140 = vmatmul.mubr.bf16.gmra.mxu0 %v943
      %v1141 = vpop.f32.mrf.mxu0
      %v1142 = vadd.f32 %v969, %v1141
      %v1143 = vpop.f32.mrf.mxu0
      %v1144 = vpop.f32.mrf.mxu0
      %v1145 = vadd.f32 %v969, %v1144
      %v1146 = vpop.f32.mrf.mxu0
      %1147 = vmatprep.mubr.bf16.mxu0 0
      %1148 = vmatmul.mubr.bf16.gmra.mxu0 %v944
      %v1149 = vpop.f32.mrf.mxu0
      %v1150 = vadd.f32 %v969, %v1149
      %v1151 = vpop.f32.mrf.mxu0
      %v1152 = vpop.f32.mrf.mxu0
      %v1153 = vadd.f32 %v969, %v1152
      %v1154 = vpop.f32.mrf.mxu0
      %1155 = vmatprep.mubr.bf16.mxu0 0
      %1156 = vmatmul.mubr.bf16.gmra.mxu0 %v945
      %v1157 = vpop.f32.mrf.mxu0
      %v1158 = vadd.f32 %v969, %v1157
      %v1159 = vpop.f32.mrf.mxu0
      %v1160 = vpop.f32.mrf.mxu0
      %v1161 = vadd.f32 %v969, %v1160
      %v1162 = vpop.f32.mrf.mxu0
      %1163 = vmatprep.mubr.bf16.mxu0 0
      %1164 = vmatmul.mubr.bf16.gmra.mxu0 %v946
      %v1165 = vpop.f32.mrf.mxu0
      %v1166 = vadd.f32 %v969, %v1165
      %v1167 = vpop.f32.mrf.mxu0
      %v1168 = vpop.f32.mrf.mxu0
      %v1169 = vadd.f32 %v969, %v1168
      %v1170 = vpop.f32.mrf.mxu0
      %1171 = vmatprep.mubr.bf16.mxu0 0
      %1172 = vmatmul.mubr.bf16.gmra.mxu0 %v947
      %v1173 = vpop.f32.mrf.mxu0
      %v1174 = vadd.f32 %v969, %v1173
      %v1175 = vpop.f32.mrf.mxu0
      %v1176 = vpop.f32.mrf.mxu0
      %v1177 = vadd.f32 %v969, %v1176
      %v1178 = vpop.f32.mrf.mxu0
      %1179 = vdwg.mxu0
      %1180 = vst [vmem:[%s280] sm:$0xff] %v1054
      %1181 = vst [vmem:[%s280 + $0x8] sm:$0xff] %v1057
      %1182 = vst [vmem:[%s280 + $0x10] sm:$0xff] %v1062
      %1183 = vst [vmem:[%s280 + $0x18] sm:$0xff] %v1065
      %1184 = vst [vmem:[%s280 + $0x20] sm:$0xff] %v1070
      %1185 = vst [vmem:[%s280 + $0x28] sm:$0xff] %v1073
      %1186 = vst [vmem:[%s280 + $0x30] sm:$0xff] %v1078
      %1187 = vst [vmem:[%s280 + $0x38] sm:$0xff] %v1081
      %1188 = vst [vmem:[%s280 + $0x40] sm:$0xff] %v1086
      %1189 = vst [vmem:[%s280 + $0x48] sm:$0xff] %v1089
      %1190 = vst [vmem:[%s280 + $0x50] sm:$0xff] %v1094
      %1191 = vst [vmem:[%s280 + $0x58] sm:$0xff] %v1097
      %1192 = vst [vmem:[%s280 + $0x60] sm:$0xff] %v1102
      %1193 = vst [vmem:[%s280 + $0x68] sm:$0xff] %v1105
      %1194 = vst [vmem:[%s280 + $0x70] sm:$0xff] %v1110
      %1195 = vst [vmem:[%s280 + $0x78] sm:$0xff] %v1113
      %1196 = vst [vmem:[%s280 + $0x80] sm:$0xff] %v1118
      %1197 = vst [vmem:[%s280 + $0x88] sm:$0xff] %v1121
      %1198 = vst [vmem:[%s280 + $0x90] sm:$0xff] %v1126
      %1199 = vst [vmem:[%s280 + $0x98] sm:$0xff] %v1129
      %1200 = vst [vmem:[%s280 + $0xa0] sm:$0xff] %v1134
      %1201 = vst [vmem:[%s280 + $0xa8] sm:$0xff] %v1137
      %1202 = vst [vmem:[%s280 + $0xb0] sm:$0xff] %v1142
      %1203 = vst [vmem:[%s280 + $0xb8] sm:$0xff] %v1145
      %1204 = vst [vmem:[%s280 + $0xc0] sm:$0xff] %v1150
      %1205 = vst [vmem:[%s280 + $0xc8] sm:$0xff] %v1153
      %1206 = vst [vmem:[%s280 + $0xd0] sm:$0xff] %v1158
      %1207 = vst [vmem:[%s280 + $0xd8] sm:$0xff] %v1161
      %1208 = vst [vmem:[%s280 + $0xe0] sm:$0xff] %v1166
      %1209 = vst [vmem:[%s280 + $0xe8] sm:$0xff] %v1169
      %1210 = vst [vmem:[%s280 + $0xf0] sm:$0xff] %v1174
      %1211 = vst [vmem:[%s280 + $0xf8] sm:$0xff] %v1177
      %s1212 = smul.u32 32, %s18
      %p1213 = scmp.lt.s32.totalorder %s1212, 63
      %s1214 = scalar_select %p1213, %s1212, 63
      %s1215 = smul.addr %s1214, 8
      %s1216 = scalar_lea.vmem %s7, %s1215
      // Predicated region
      $region49: #{dueling_dqn_forward.1} parent=47 // pred_check
        %p1217 = pneg %p188
      $region50: #{dueling_dqn_forward.1} parent=47 // pred_check_branch
        %1219 = sbr.rel (%p1217) target = $region52
      $region51: #{dueling_dqn_forward.1} parent=47 // pred_region
        %s1220 = smul.u32 32, %s18
      $region52: #{dueling_dqn_forward.1} parent=47 // pred_fallthru
        _
    $region48: #{dueling_dqn_forward.1} parent=5 // pred_fallthru
      _
    %p1221 = scmp.le.s32.totalorder 2, %s13
    // Predicated region
    $region53: #{dueling_dqn_forward.1} parent=5 // pred_check
      %p1222 = pneg %p1221
    $region54: #{dueling_dqn_forward.1} parent=5 // pred_check_branch
      %1224 = sbr.rel (%p1222) target = $region56
    $region55: #{dueling_dqn_forward.1} parent=5 // pred_region
      %s1225 = ssub.s32 %s13, 2
      // Predicated region
      $region57: #{dueling_dqn_forward.1} parent=55 // pred_check
        %p1226 = pneg %p194
      $region58: #{dueling_dqn_forward.1} parent=55 // pred_check_branch
        %1228 = sbr.rel (%p1226) target = $region60
      $region59: #{dueling_dqn_forward.1} parent=55 // pred_region
        %s1229 = smul.u32 32, %s19
        %p1230 = scmp.lt.s32.totalorder %s1229, 63
        %s1231 = scalar_select %p1230, %s1229, 63
        %s1232 = smul.addr %s1231, 8
        %s1233 = scalar_lea.vmem %s7, %s1232
      $region60: #{dueling_dqn_forward.1} parent=55 // pred_fallthru
        _
    $region56: #{dueling_dqn_forward.1} parent=5 // pred_fallthru
      _
  $region6: #{dueling_dqn_forward.1} parent=0 // loop_footer
    %s17 = sadd.s32 1, %s13
  $region7: #{dueling_dqn_forward.1} parent=0 // loop_footer_branch
    %12 = sbr.rel target = $region3
  $region8: #{dueling_dqn_forward.1} parent=0 // loop_exit
    _

</llo_original>
